<compile_context>
chip_gen: v7x
topology: tpu7x:2x2x1
jax: 0.10.0
libtpu: 0.0.40
codegen_flags: <defaults>
</compile_context>

<pallas_src>
import functools

import jax
import jax.numpy as jnp
from jax.experimental import pallas as pl
from jax.experimental.pallas import tpu as pltpu


# ---------------------------------------------------------------------------
# Kernels
# ---------------------------------------------------------------------------
def _revin_norm_kernel(x_ref, m_ref, out_ref, stats_ref, *, eps):
    """Masked path. x_ref: (TB,TC,L); m_ref: (TB,1,L) int8; out_ref: (TB,TC,L);
    stats_ref: (TB,TC,2) f32 with [...,0]=mean, [...,1]=stdev."""
    x = x_ref[...].astype(jnp.float32)
    m = m_ref[...].astype(jnp.float32)                           # (TB,1,L)
    cnt = jnp.maximum(jnp.sum(m, axis=-1, keepdims=True), 1.0)   # (TB,1,1)
    inv_cnt = 1.0 / cnt                                          # per-row divide only
    mean = jnp.sum(x * m, axis=-1, keepdims=True) * inv_cnt      # (TB,TC,1) nanmean
    diff = x - mean                                              # reused below
    var = jnp.sum(diff * diff * m, axis=-1, keepdims=True) * inv_cnt
    std = jnp.sqrt(var) + eps              # eps OUTSIDE sqrt: matches nanstd(...)+eps
    inv_std = 1.0 / std                    # per-row only, not per-element
    out_ref[...] = (diff * inv_std).astype(out_ref.dtype)
    stats_ref[...] = jnp.concatenate([mean, std], axis=-1)       # one fused store


def _revin_norm_nomask_kernel(x_ref, out_ref, stats_ref, *, eps, inv_len):
    """mask=None specialization: no mask DMA, count folded to constant 1/L."""
    x = x_ref[...].astype(jnp.float32)
    mean = jnp.sum(x, axis=-1, keepdims=True) * inv_len
    diff = x - mean
    var = jnp.sum(diff * diff, axis=-1, keepdims=True) * inv_len
    std = jnp.sqrt(var) + eps
    inv_std = 1.0 / std
    out_ref[...] = (diff * inv_std).astype(out_ref.dtype)
    stats_ref[...] = jnp.concatenate([mean, std], axis=-1)


def _revin_denorm_kernel(x_ref, stats_ref, out_ref):
    """x_ref: (TB,TC,L); stats_ref: (TB,TC,2) packed [mean, stdev]; out: (TB,TC,L)."""
    x = x_ref[...].astype(jnp.float32)
    stats = stats_ref[...].astype(jnp.float32)
    mean = stats[..., 0:1]
    std = stats[..., 1:2]
    out_ref[...] = (x * std + mean).astype(out_ref.dtype)


# ---------------------------------------------------------------------------
# Tiling helpers
# ---------------------------------------------------------------------------
def _sublane_multiple(itemsize):
    # Packed sublanes per vreg: f32 -> 8, bf16 -> 16, int8/fp8 -> 32.
    return max(8, 32 // max(int(itemsize), 1))


def _vmem_limit_bytes():
    """Generation-aware scoped VMEM limit (~half of physical), safe fallback."""
    cap = 64 * 1024 * 1024                      # conservative fallback
    try:
        info = pltpu.get_tpu_info()
        cap = int(getattr(info, "vmem_capacity_bytes", cap))
    except Exception:
        pass
    # 128 MiB physical (v5e/v6e) -> 64 MiB limit; 64 MiB per-TC (v7x) -> 32 MiB.
    return int(max(16 * 1024 * 1024, min(cap // 2, 64 * 1024 * 1024)))


def _pick_tiles(B, C, L, itemsize, vmem_limit):
    """Pick (TB, TC) so each grid step moves a large block but stays in budget."""
    sub = _sublane_multiple(itemsize)
    budget = vmem_limit // 2                     # headroom for double buffering etc.
    # ~ 2 bufs * (in + out) + f32 intermediates ~= 8 * L * 4 bytes per channel row
    bytes_per_row = 8 * L * max(int(itemsize), 4)
    rows = max(budget // max(bytes_per_row, 1), sub)

    if rows < C:
        # Channel axis must be split; one batch per step.
        tb = 1
        tc = min(C, max(sub, (rows // sub) * sub))
    else:
        # Whole channel dim fits -> fold batches for fatter steps.
        tc = C
        tb = max(1, min(B, rows // max(C, 1)))

    # Megacore balance (v7x): keep >= 2 'parallel' grid steps when the problem is
    # big enough (>= ~1 MiB) to be worth feeding both TensorCores.
    nb, nc = -(-B // tb), -(-C // tc)
    if nb * nc == 1 and B * C * L * max(int(itemsize), 1) >= (1 << 20):
        if B >= 2:
            tb = -(-B // 2)
        elif C >= 2 * sub:
            half = -(-C // 2)
            tc = min(C, max(sub, -(-half // sub) * sub))
    return tb, tc


# ---------------------------------------------------------------------------
# Wrappers
# ---------------------------------------------------------------------------
def revin_norm(x, mask=None, eps=1e-5, *, tile_b=None, tile_c=None):
    """x: (B, C, L); mask: (B, L) (nonzero = valid) or None.

    Returns (x_norm, mean, stdev) with mean/stdev of shape (B, C, 1),
    matching RevIN._get_statistics / _normalize (affine=False).
    """
    B, C, L = x.shape
    vmem_limit = _vmem_limit_bytes()
    tb, tc = _pick_tiles(B, C, L, jnp.dtype(x.dtype).itemsize, vmem_limit)
    if tile_b is not None:
        tb = int(tile_b)
    if tile_c is not None:
        tc = int(tile_c)
    grid = (pl.cdiv(B, tb), pl.cdiv(C, tc))

    out_shapes = (
        jax.ShapeDtypeStruct((B, C, L), x.dtype),
        jax.ShapeDtypeStruct((B, C, 2), jnp.float32),
    )
    out_specs = (
        pl.BlockSpec((tb, tc, L), lambda b, c: (b, c, 0)),
        pl.BlockSpec((tb, tc, 2), lambda b, c: (b, c, 0)),
    )
    cparams = pltpu.CompilerParams(
        dimension_semantics=("parallel", "parallel"),
        vmem_limit_bytes=vmem_limit,
    )

    if mask is None:
        kernel = functools.partial(_revin_norm_nomask_kernel, eps=eps,
                                   inv_len=1.0 / float(L))
        out, stats = pl.pallas_call(
            kernel,
            out_shape=out_shapes,
            grid=grid,
            in_specs=[pl.BlockSpec((tb, tc, L), lambda b, c: (b, c, 0))],
            out_specs=out_specs,
            compiler_params=cparams,
        )(x)
    else:
        mask3 = (mask != 0).astype(jnp.int8).reshape(B, 1, L)
        kernel = functools.partial(_revin_norm_kernel, eps=eps)
        out, stats = pl.pallas_call(
            kernel,
            out_shape=out_shapes,
            grid=grid,
            in_specs=[
                pl.BlockSpec((tb, tc, L), lambda b, c: (b, c, 0)),
                pl.BlockSpec((tb, 1, L), lambda b, c: (b, 0, 0)),  # (B,L) mask, no bcast
            ],
            out_specs=out_specs,
            compiler_params=cparams,
        )(x, mask3)

    mean = stats[:, :, 0:1]
    stdev = stats[:, :, 1:2]
    return out, mean, stdev


def revin_denorm(x, mean, stdev, *, tile_b=None, tile_c=None):
    """x: (B, C, L); mean, stdev: (B, C, 1). Returns x * stdev + mean."""
    B, C, L = x.shape
    vmem_limit = _vmem_limit_bytes()
    tb, tc = _pick_tiles(B, C, L, jnp.dtype(x.dtype).itemsize, vmem_limit)
    if tile_b is not None:
        tb = int(tile_b)
    if tile_c is not None:
        tc = int(tile_c)
    grid = (pl.cdiv(B, tb), pl.cdiv(C, tc))

    stats = jnp.concatenate(
        [mean.astype(jnp.float32).reshape(B, C, 1),
         stdev.astype(jnp.float32).reshape(B, C, 1)],
        axis=-1,
    )

    out = pl.pallas_call(
        _revin_denorm_kernel,
        out_shape=jax.ShapeDtypeStruct((B, C, L), x.dtype),
        grid=grid,
        in_specs=[
            pl.BlockSpec((tb, tc, L), lambda b, c: (b, c, 0)),
            pl.BlockSpec((tb, tc, 2), lambda b, c: (b, c, 0)),   # packed stats, one DMA
        ],
        out_specs=pl.BlockSpec((tb, tc, L), lambda b, c: (b, c, 0)),
        compiler_params=pltpu.CompilerParams(
            dimension_semantics=("parallel", "parallel"),
            vmem_limit_bytes=vmem_limit,
        ),
    )(x, stats)
    return out


# ---------------------------------------------------------------------------
# Pure-JAX reference (mirrors the torch nanmean/nanstd implementation)
# ---------------------------------------------------------------------------
def _ref_revin_norm(x, mask, eps=1e-5):
    B, C, L = x.shape
    if mask is None:
        mask = jnp.ones((B, L), dtype=jnp.float32)
    m = jnp.broadcast_to(mask[:, None, :].astype(bool), (B, C, L))
    masked = jnp.where(m, x, jnp.nan)
    mean = jnp.nanmean(masked, axis=-1, keepdims=True)
    var = jnp.nanmean(jnp.square(masked - mean), axis=-1, keepdims=True)
    std = jnp.sqrt(var) + eps
    return (x - mean) / std, mean, std


if __name__ == "__main__":
    key = jax.random.PRNGKey(0)
    kx, kx2, km2 = jax.random.split(key, 3)

    # --- case 1: small canonical shapes (B, C, L) = (2, 4, 16) -----------------
    B, C, L = 2, 4, 16
    x = jax.random.normal(kx, (B, C, L), dtype=jnp.float32)
    mask = jnp.ones((B, L), dtype=jnp.float32)
    mask = mask.at[0, L - 3:].set(0.0)

    x_norm, mean, stdev = revin_norm(x, mask, eps=1e-5)
    jax.block_until_ready(x_norm)
    ref_norm, ref_mean, ref_std = _ref_revin_norm(x, mask, eps=1e-5)
    assert jnp.allclose(x_norm, ref_norm, atol=1e-5, rtol=1e-5)
    assert jnp.allclose(mean, ref_mean, atol=1e-5, rtol=1e-5)
    assert jnp.allclose(stdev, ref_std, atol=1e-5, rtol=1e-5)

    # mask=None specialized path
    x_norm2, mean2, stdev2 = revin_norm(x, None, eps=1e-5)
    jax.block_until_ready(x_norm2)
    ref_norm2, ref_mean2, ref_std2 = _ref_revin_norm(x, None, eps=1e-5)
    assert jnp.allclose(x_norm2, ref_norm2, atol=1e-5, rtol=1e-5)
    assert jnp.allclose(mean2, ref_mean2, atol=1e-5, rtol=1e-5)
    assert jnp.allclose(stdev2, ref_std2, atol=1e-5, rtol=1e-5)

    # denorm round-trip (packed-stats input)
    x_back = revin_denorm(x_norm, mean, stdev)
    jax.block_until_ready(x_back)
    assert jnp.allclose(x_back, x, atol=1e-4, rtol=1e-4)

    # --- case 2: exercise padded / multi-step tiling (forced tiles) ------------
    B2, C2, L2 = 3, 12, 128
    x2 = jax.random.normal(kx2, (B2, C2, L2), dtype=jnp.float32)
    mask2 = (jax.random.uniform(km2, (B2, L2)) > 0.2).astype(jnp.float32)
    mask2 = mask2.at[:, 0].set(1.0)  # keep every row non-empty

    xn2, mn2, sd2 = revin_norm(x2, mask2, eps=1e-5, tile_b=2, tile_c=8)
    jax.block_until_ready(xn2)
    rn2, rm2, rs2 = _ref_revin_norm(x2, mask2, eps=1e-5)
    assert jnp.allclose(xn2, rn2, atol=1e-5, rtol=1e-5)
    assert jnp.allclose(mn2, rm2, atol=1e-5, rtol=1e-5)
    assert jnp.allclose(sd2, rs2, atol=1e-5, rtol=1e-5)

    xb2 = revin_denorm(xn2, mn2, sd2, tile_b=2, tile_c=8)
    jax.block_until_ready(xb2)
    assert jnp.allclose(xb2, x2, atol=1e-4, rtol=1e-4)

    print("KERNEL_OK")
</pallas_src>

<mosaic_0001>
module attributes {stable_mosaic.version = 11 : i64} {
  func.func @_revin_norm_kernel(%arg0: i32, %arg1: i32, %arg2: memref<2x4x16xf32, #tpu.memory_space<vmem>>, %arg3: memref<2x1x16xi8, #tpu.memory_space<vmem>>, %arg4: memref<2x4x16xf32, #tpu.memory_space<vmem>>, %arg5: memref<2x4x2xf32, #tpu.memory_space<vmem>>) attributes {dimension_semantics = [#tpu.dimension_semantics<parallel>, #tpu.dimension_semantics<parallel>], iteration_bounds = array<i64: 1, 1>, scalar_prefetch = 0 : i64, scratch_operands = 0 : i64, tpu.core_type = #tpu.core_type<tc>, window_params = [{transform_indices = @transform_0, window_bounds = array<i64: 2, 4, 16>}, {transform_indices = @transform_1, window_bounds = array<i64: 2, 1, 16>}, {transform_indices = @transform_2, window_bounds = array<i64: 2, 4, 16>}, {transform_indices = @transform_3, window_bounds = array<i64: 2, 4, 2>}]} {
    %c0 = arith.constant 0 : index
    %c0_0 = arith.constant 0 : index
    %c0_1 = arith.constant 0 : index
    %0 = vector.load %arg2[%c0, %c0_0, %c0_1] : memref<2x4x16xf32, #tpu.memory_space<vmem>>, vector<2x4x16xf32>
    %c0_2 = arith.constant 0 : index
    %c0_3 = arith.constant 0 : index
    %c0_4 = arith.constant 0 : index
    %1 = vector.load %arg3[%c0_2, %c0_3, %c0_4] : memref<2x1x16xi8, #tpu.memory_space<vmem>>, vector<2x1x16xi8>
    %2 = arith.sitofp %1 : vector<2x1x16xi8> to vector<2x1x16xf32>
    %cst = arith.constant dense<0.000000e+00> : vector<2x1xf32>
    %3 = vector.multi_reduction <add>, %2, %cst [2] : vector<2x1x16xf32> to vector<2x1xf32>
    %4 = vector.shape_cast %3 : vector<2x1xf32> to vector<2x1x1xf32>
    %cst_5 = arith.constant 1.000000e+00 : f32
    %5 = vector.broadcast %cst_5 : f32 to vector<2x1x1xf32>
    %6 = arith.maximumf %4, %5 : vector<2x1x1xf32>
    %cst_6 = arith.constant 1.000000e+00 : f32
    %7 = vector.broadcast %cst_6 : f32 to vector<2x1x1xf32>
    %8 = arith.divf %7, %6 : vector<2x1x1xf32>
    %9 = vector.broadcast %2 : vector<2x1x16xf32> to vector<2x4x16xf32>
    %10 = arith.mulf %0, %9 : vector<2x4x16xf32>
    %cst_7 = arith.constant dense<0.000000e+00> : vector<2x4xf32>
    %11 = vector.multi_reduction <add>, %10, %cst_7 [2] : vector<2x4x16xf32> to vector<2x4xf32>
    %12 = vector.shape_cast %11 : vector<2x4xf32> to vector<2x4x1xf32>
    %13 = vector.broadcast %8 : vector<2x1x1xf32> to vector<2x4x1xf32>
    %14 = arith.mulf %12, %13 : vector<2x4x1xf32>
    %15 = vector.broadcast %14 : vector<2x4x1xf32> to vector<2x4x16xf32>
    %16 = arith.subf %0, %15 : vector<2x4x16xf32>
    %17 = arith.mulf %16, %16 : vector<2x4x16xf32>
    %18 = vector.broadcast %2 : vector<2x1x16xf32> to vector<2x4x16xf32>
    %19 = arith.mulf %17, %18 : vector<2x4x16xf32>
    %cst_8 = arith.constant dense<0.000000e+00> : vector<2x4xf32>
    %20 = vector.multi_reduction <add>, %19, %cst_8 [2] : vector<2x4x16xf32> to vector<2x4xf32>
    %21 = vector.shape_cast %20 : vector<2x4xf32> to vector<2x4x1xf32>
    %22 = vector.broadcast %8 : vector<2x1x1xf32> to vector<2x4x1xf32>
    %23 = arith.mulf %21, %22 : vector<2x4x1xf32>
    %24 = math.sqrt %23 : vector<2x4x1xf32>
    %cst_9 = arith.constant 9.99999974E-6 : f32
    %25 = vector.broadcast %cst_9 : f32 to vector<2x4x1xf32>
    %26 = arith.addf %24, %25 : vector<2x4x1xf32>
    %cst_10 = arith.constant 1.000000e+00 : f32
    %27 = vector.broadcast %cst_10 : f32 to vector<2x4x1xf32>
    %28 = arith.divf %27, %26 : vector<2x4x1xf32>
    %29 = vector.broadcast %28 : vector<2x4x1xf32> to vector<2x4x16xf32>
    %30 = arith.mulf %16, %29 : vector<2x4x16xf32>
    %c0_11 = arith.constant 0 : index
    %c0_12 = arith.constant 0 : index
    %c0_13 = arith.constant 0 : index
    %31 = vector.load %arg4[%c0_11, %c0_12, %c0_13] : memref<2x4x16xf32, #tpu.memory_space<vmem>>, vector<2x4x16xf32>
    tpu.vector_store %arg4[%c0_11, %c0_12, %c0_13], %30 {strides = array<i32>} : memref<2x4x16xf32, #tpu.memory_space<vmem>>, vector<2x4x16xf32>,
    %32 = tpu.concatenate %14, %26 in 2 : vector<2x4x1xf32>, vector<2x4x1xf32> -> vector<2x4x2xf32>
    %c0_14 = arith.constant 0 : index
    %c0_15 = arith.constant 0 : index
    %c0_16 = arith.constant 0 : index
    %33 = vector.load %arg5[%c0_14, %c0_15, %c0_16] : memref<2x4x2xf32, #tpu.memory_space<vmem>>, vector<2x4x2xf32>
    tpu.vector_store %arg5[%c0_14, %c0_15, %c0_16], %32 {strides = array<i32>} : memref<2x4x2xf32, #tpu.memory_space<vmem>>, vector<2x4x2xf32>,
    return
  }
  func.func @transform_0(%arg0: i32, %arg1: i32) -> (i32, i32, i32) {
    %c0_i32 = arith.constant 0 : i32
    %c0_i32_0 = arith.constant 0 : i32
    return %arg0, %arg1, %c0_i32 : i32, i32, i32
  }
  func.func @transform_1(%arg0: i32, %arg1: i32) -> (i32, i32, i32) {
    %c0_i32 = arith.constant 0 : i32
    %c0_i32_0 = arith.constant 0 : i32
    %c0_i32_1 = arith.constant 0 : i32
    return %arg0, %c0_i32, %c0_i32_0 : i32, i32, i32
  }
  func.func @transform_2(%arg0: i32, %arg1: i32) -> (i32, i32, i32) {
    %c0_i32 = arith.constant 0 : i32
    %c0_i32_0 = arith.constant 0 : i32
    return %arg0, %arg1, %c0_i32 : i32, i32, i32
  }
  func.func @transform_3(%arg0: i32, %arg1: i32) -> (i32, i32, i32) {
    %c0_i32 = arith.constant 0 : i32
    %c0_i32_0 = arith.constant 0 : i32
    return %arg0, %arg1, %c0_i32 : i32, i32, i32
  }
}

</mosaic_0001>

<llo_original>
// kernel: tpu_custom_call.1
$region0: #{tpu_custom_call.1}
  #allocation0 [shape = 'u32[]', space=smem, size = 0x4, offset = 0x4, fixed_abs, tag = 'smem constant byte address 0x4 - core index']
  #allocation1 [shape = 'u32[144,128]{1,0:T(1,128)}', space=vmem, size = 0x12000, scoped, tag = 'internal scratch']
  %s0 = inlined_call_operand.hbm [shape: f32[2,4,16], index: 0, kind: input, shape index: {}]
  %s1 = inlined_call_operand.vmem [shape: s8[2,1,16], index: 1, kind: input, shape index: {}]
  %s2 = inlined_call_operand.hbm [shape: f32[2,4,16], index: 2, kind: output, shape index: {0}]
  %s3 = inlined_call_operand.vmem [shape: f32[2,4,2], index: 3, kind: output, shape index: {1}]
  %4 = xla_tuple %s2, %s3
  %s5 = sld [smem:[#allocation0]]
  $region30: #{tpu_custom_call.1} parent=0
    _
  %s7 = ssub.s32 1, %s5
  %s8 = scalar_select 0, %s7, %s5
  $region1: #{tpu_custom_call.1} parent=0
    #allocation2 [shape = 'u8[4096]{0}', space=vmem, size = 0x1000, scoped, tag = 'input window, operand 0, single buffered']
    #allocation3 [shape = 's32[1]{0}', space=sflag, size = 0x4, scoped, tag = 'scoped memory for tpu_custom_call.1']
    #allocation4 [shape = 's32[1]{0}', space=sflag, size = 0x4, scoped, tag = 'scoped memory for tpu_custom_call.1']
    #allocation5 [shape = 'u8[4096]{0}', space=vmem, size = 0x1000, scoped, tag = 'output window, operand 0, single buffered']
    %9 = vsyncpa [#allocation3], 0
    %10 = vsyncpa [#allocation4], 0
    // Predicated region
    $region2: #{tpu_custom_call.1} parent=1 // pred_check
      _
    $region3: #{tpu_custom_call.1} parent=1 // pred_check_branch
      %12 = sbr.rel (0) target = $region5
    $region4: #{tpu_custom_call.1} parent=1 // pred_region
      %s14 = ssub.s32 128, 128
      %15 = vsyncadd [#allocation3], %s14
      %s16 = sshll.u32 [#allocation2], 4
      %s17 = int_to_ptr.vmem [resolvable:$true] %s16
      %22 = dma.hbm_to_vmem [thread:$0]  %s0, 128, %s17, [#allocation3], 64, 64, 4
    $region5: #{tpu_custom_call.1} parent=1 // pred_fallthru
      _
    // Predicated region
    $region6: #{tpu_custom_call.1} parent=1 // pred_check
      _
    $region7: #{tpu_custom_call.1} parent=1 // pred_check_branch
      %24 = sbr.rel (0) target = $region9
    $region8: #{tpu_custom_call.1} parent=1 // pred_region
      _
    $region9: #{tpu_custom_call.1} parent=1 // pred_fallthru
      _
    // Predicated region
    $region10: #{tpu_custom_call.1} parent=1 // pred_check
      _
    $region11: #{tpu_custom_call.1} parent=1 // pred_check_branch
      %26 = sbr.rel (0) target = $region13
    $region12: #{tpu_custom_call.1} parent=1 // pred_region
      %27 = dma.done [#allocation3], 128
    $region13: #{tpu_custom_call.1} parent=1 // pred_fallthru
      _
    %v28 = vld [vmem:[#allocation2] sm:$0xf]
    %v29 = vld [vmem:[#allocation2 + $0x4] sm:$0xf]
    %v30 = vld [vmem:[%s1] sm:$0x1]
    %v31 = vld [vmem:[%s1 + $0x1] sm:$0x1]
    %v32 = vunpack.c.0.s8 %v30
    %v33 = vunpack.c.0.s8 %v31
    %v34 = vcvt.s32.f32 %v32
    %v35 = vcvt.s32.f32 %v33
    %vm36 = vcmask 122880
    %v37 = vsel %vm36, %v34, 0.0
    %38 = vadd.xlane.f32.xlu0 %v37
    %v39 = vpop.xlane.xlu0 %38
    %v40 = vsel %vm36, %v35, 0.0
    %41 = vadd.xlane.f32.xlu0 %v40
    %v42 = vpop.xlane.xlu0 %41
    %v43 = vmax.f32 %v39, 1.0
    %v44 = vmax.f32 %v42, 1.0
    %v45 = vrcp.pop %v43
    %v46 = vmul.f32 1.0, %v45
    %v47 = vrcp.pop %v44
    %v48 = vmul.f32 1.0, %v47
    %v49 = vlaneseq
    %v50 = vshrl.u32 %v49, 7
    %v51 = vsub.s32 0, %v50
    %v52 = vrot.slane %v34, %v51
    %v53 = vlaneseq
    %v54 = vshrl.u32 %v53, 7
    %v55 = vsub.s32 0, %v54
    %v56 = vrot.slane %v35, %v55
    %v57 = vmul.f32 %v28, %v52
    %v58 = vmul.f32 %v29, %v56
    %vm59 = vcmask 125952
    %v60 = vsel %vm59, %v57, 0.0
    %61 = vadd.xlane.f32.xlu0 %v60
    %v62 = vpop.xlane.xlu0 %61
    %v63 = vsel %vm59, %v58, 0.0
    %64 = vadd.xlane.f32.xlu0 %v63
    %v65 = vpop.xlane.xlu0 %64
    %v66 = vlaneseq
    %v67 = vshrl.u32 %v66, 7
    %v68 = vsub.s32 0, %v67
    %v69 = vrot.slane %v46, %v68
    %v70 = vlaneseq
    %v71 = vshrl.u32 %v70, 7
    %v72 = vsub.s32 0, %v71
    %v73 = vrot.slane %v48, %v72
    %v74 = vmul.f32 %v62, %v69
    %v75 = vmul.f32 %v65, %v73
    %v76 = vsub.f32 %v28, %v74
    %v77 = vsub.f32 %v29, %v75
    %v78 = vmul.f32 %v76, %v76
    %v79 = vmul.f32 %v77, %v77
    %v80 = vmul.f32 %v78, %v52
    %v81 = vmul.f32 %v79, %v56
    %v82 = vsel %vm59, %v80, 0.0
    %83 = vadd.xlane.f32.xlu0 %v82
    %v84 = vpop.xlane.xlu0 %83
    %v85 = vsel %vm59, %v81, 0.0
    %86 = vadd.xlane.f32.xlu0 %v85
    %v87 = vpop.xlane.xlu0 %86
    %v88 = vmul.f32 %v84, %v69
    %v89 = vmul.f32 %v87, %v73
    %v90 = vrsqrt.pop %v88
    %v91 = vmul.f32 %v88, %v90
    %vm92 = vcmp.eq.f32.partialorder %v88, inf
    %v93 = vsel %vm92, %v88, %v91
    %vm94 = vcmp.eq.f32.partialorder %v88, 0.0
    %v95 = vand.u32 %v88, 2147483648
    %v96 = vsel %vm94, %v95, %v93
    %v97 = vrsqrt.pop %v89
    %v98 = vmul.f32 %v89, %v97
    %vm99 = vcmp.eq.f32.partialorder %v89, inf
    %v100 = vsel %vm99, %v89, %v98
    %vm101 = vcmp.eq.f32.partialorder %v89, 0.0
    %v102 = vand.u32 %v89, 2147483648
    %v103 = vsel %vm101, %v102, %v100
    %v104 = vadd.f32 %v96, 1e-05
    %v105 = vadd.f32 %v103, 1e-05
    %v106 = vrcp.pop %v104
    %v107 = vmul.f32 1.0, %v106
    %v108 = vrcp.pop %v105
    %v109 = vmul.f32 1.0, %v108
    %v110 = vmul.f32 %v76, %v107
    %v111 = vmul.f32 %v77, %v109
    %112 = vst.msk [vmem:[#allocation5] sm:$0xf] %vm59, %v110
    %113 = vst.msk [vmem:[#allocation5 + $0x4] sm:$0xf] %vm59, %v111
    %vm114 = vcmask 7168
    %v115 = vsel %vm114, %v74, %v104
    %v116 = vsel %vm114, %v75, %v105
    %vm117 = vcmask 11264
    %118 = vst.msk [vmem:[%s3] sm:$0xf] %vm117, %v115
    %119 = vst.msk [vmem:[%s3 + $0x4] sm:$0xf] %vm117, %v116
    // Predicated region
    $region14: #{tpu_custom_call.1} parent=1 // pred_check
      _
    $region15: #{tpu_custom_call.1} parent=1 // pred_check_branch
      %121 = sbr.rel (0) target = $region17
    $region16: #{tpu_custom_call.1} parent=1 // pred_region
      %s123 = ssub.s32 128, 128
      %124 = vsyncadd [#allocation4], %s123
      %s125 = sshll.u32 [#allocation5], 4
      %s126 = int_to_ptr.vmem [resolvable:$true] %s125
      %131 = dma.vmem_to_hbm [thread:$0]  %s126, 128, %s2, [#allocation4], 64, 64, 4
    $region17: #{tpu_custom_call.1} parent=1 // pred_fallthru
      _
    // Predicated region
    $region18: #{tpu_custom_call.1} parent=1 // pred_check
      _
    $region19: #{tpu_custom_call.1} parent=1 // pred_check_branch
      %133 = sbr.rel (0) target = $region21
    $region20: #{tpu_custom_call.1} parent=1 // pred_region
      _
    $region21: #{tpu_custom_call.1} parent=1 // pred_fallthru
      _
    // Predicated region
    $region22: #{tpu_custom_call.1} parent=1 // pred_check
      _
    $region23: #{tpu_custom_call.1} parent=1 // pred_check_branch
      %135 = sbr.rel (0) target = $region25
    $region24: #{tpu_custom_call.1} parent=1 // pred_region
      %136 = dma.done [#allocation4], 128
    $region25: #{tpu_custom_call.1} parent=1 // pred_fallthru
      _
    // Predicated region
    $region26: #{tpu_custom_call.1} parent=1 // pred_check
      _
    $region27: #{tpu_custom_call.1} parent=1 // pred_check_branch
      %138 = sbr.rel (0) target = $region29
    $region28: #{tpu_custom_call.1} parent=1 // pred_region
      _
    $region29: #{tpu_custom_call.1} parent=1 // pred_fallthru
      _
    %139 = vsyncpa [#allocation3], 1
    %140 = vsyncpa [#allocation4], 1

</llo_original>
